<compile_context>
chip_gen: v5e
topology: v5e:2x2
jax: 0.10.0
libtpu: 0.0.40
codegen_flags: <defaults>
</compile_context>

<pallas_src>
import jax
import jax.numpy as jnp
from jax.experimental import pallas as pl
from jax.experimental.pallas import tpu as pltpu

# ---- synthetic pipe_config ----------------------------------------------
SAMPLE_RATE = 16000
N_FFT = 64
HOP = 32
N_MELS = 16
F_MIN = 10.0
USE_LOG = True            # db_scale must be False when use_log is True
N_FREQS = N_FFT // 2 + 1  # 33
F_PACK = 128              # packed frequency axis: re in [0,64), im in [64,128)
IM_OFF = 64


def _round_up(a, b):
    return ((a + b - 1) // b) * b


# ---- deterministic parameter construction (plain JAX glue) ---------------
def _hann_window(n_fft):
    k = jnp.arange(n_fft, dtype=jnp.float32)
    return 0.5 * (1.0 - jnp.cos(2.0 * jnp.pi * k / n_fft))   # periodic hann


def _hz_to_mel(f):
    return 2595.0 * jnp.log10(1.0 + f / 700.0)               # HTK


def _mel_to_hz(m):
    return 700.0 * (10.0 ** (m / 2595.0) - 1.0)


def _mel_filterbank(n_freqs, f_min, f_max, n_mels, sample_rate):
    # torchaudio.functional.melscale_fbanks(mel_scale="htk", norm=None)
    all_freqs = jnp.linspace(0.0, sample_rate / 2.0, n_freqs)
    m_min = _hz_to_mel(jnp.asarray(f_min, jnp.float32))
    m_max = _hz_to_mel(jnp.asarray(f_max, jnp.float32))
    m_pts = jnp.linspace(m_min, m_max, n_mels + 2)
    f_pts = _mel_to_hz(m_pts)
    f_diff = f_pts[1:] - f_pts[:-1]
    slopes = f_pts[None, :] - all_freqs[:, None]              # (n_freqs, n_mels+2)
    down = -slopes[:, :-2] / f_diff[:-1]
    up = slopes[:, 2:] / f_diff[1:]
    fb = jnp.maximum(0.0, jnp.minimum(down, up))
    return fb.astype(jnp.float32)                             # (n_freqs, n_mels)


def _packed_constants():
    """Window-folded, re/im-packed DFT and duplicated mel filterbank.

    dft_t : (128, n_fft)  rows [0,33) = win*cos, rows [64,97) = -win*sin, else 0
    fb_t  : (n_mels, 128) cols [0,33) = fb.T, cols [64,97) = fb.T, else 0
    Then  mel = fb_t @ ((dft_t @ frames_t)^2)  ==  (re^2 + im^2) @ fb, exactly.
    """
    win = _hann_window(N_FFT)
    n = jnp.arange(N_FFT, dtype=jnp.float32)[:, None]
    f = jnp.arange(N_FREQS, dtype=jnp.float32)[None, :]
    ang = 2.0 * jnp.pi * n * f / N_FFT
    cosm = jnp.cos(ang) * win[:, None]                        # (n_fft, n_freqs)
    sinm = -jnp.sin(ang) * win[:, None]

    dft = jnp.zeros((N_FFT, F_PACK), jnp.float32)
    dft = dft.at[:, :N_FREQS].set(cosm)
    dft = dft.at[:, IM_OFF:IM_OFF + N_FREQS].set(sinm)

    fb = _mel_filterbank(N_FREQS, F_MIN, SAMPLE_RATE / 2.0, N_MELS, SAMPLE_RATE)
    fb2 = jnp.zeros((F_PACK, N_MELS), jnp.float32)
    fb2 = fb2.at[:N_FREQS, :].set(fb)
    fb2 = fb2.at[IM_OFF:IM_OFF + N_FREQS, :].set(fb)

    return dft.T, fb2.T                                       # (128, n_fft), (n_mels, 128)


# ---- Pallas kernel: packed DFT -> power (folded by 2nd matmul) -> mel -> log ----
def _logmel_kernel(ft_ref, dft_ref, fb_ref, out_ref):
    ft = ft_ref[0]                                            # (n_fft, TT), time in lanes
    s = jnp.dot(dft_ref[...], ft,
                preferred_element_type=jnp.float32)           # (128, TT) packed re|im
    mel = jnp.dot(fb_ref[...], s * s,
                  preferred_element_type=jnp.float32)         # (n_mels, TT) = power @ fb
    if USE_LOG:
        mel = jnp.log(jnp.maximum(mel, 1e-6))                 # clamp(min=1e-6).log()
    out_ref[0] = mel
    # TODO(synk): db_scale (amplitude_to_DB) branch and training-time
    # Time/FrequencyMasking augmentation are not exercised in inference.


def log_mel_spectrogram(x):
    """x: (B, L) float32 audio -> (B, n_mels, T) float32 log-mel spectrogram."""
    B, L = x.shape
    x = x.astype(jnp.float32)

    pad = N_FFT // 2
    assert L > pad, "reflect padding requires L > n_fft // 2"
    assert N_FFT == 2 * HOP, "framing shortcut assumes hop == n_fft / 2"

    # center=True reflect padding + framing (glue, not the hot path)
    x_pad = jnp.pad(x, ((0, 0), (pad, pad)), mode="reflect")
    T = 1 + (x_pad.shape[1] - N_FFT) // HOP                   # = 1 + L // hop

    # frame t = x_pad[t*hop : t*hop + n_fft] = concat(block[t], block[t+1]);
    # built lane-major (time in lanes) so the kernel needs no transposes at all.
    blocks = x_pad[:, :(T + 1) * HOP].reshape(B, T + 1, HOP)
    blocks_t = jnp.transpose(blocks, (0, 2, 1))               # (B, hop, T+1)
    frames_t = jnp.concatenate(
        [blocks_t[:, :, :T], blocks_t[:, :, 1:T + 1]], axis=1)  # (B, n_fft, T)

    # Time tile: big (lane-dense, amortizes ~0.35us/step grid overhead) but keep
    # >= 2 grid steps when there is enough work so both v7x TensorCores are used.
    if T >= 4 * 512:
        TT = 512
    elif T >= 2 * 256:
        TT = 256
    else:
        TT = 128
    T_pad = _round_up(T, TT)
    frames_t = jnp.pad(frames_t, ((0, 0), (0, 0), (0, T_pad - T)))

    dft_t, fb_t = _packed_constants()

    flops = 2 * B * T_pad * (F_PACK * N_FFT + N_MELS * F_PACK)
    bytes_accessed = 4 * (frames_t.size + B * N_MELS * T_pad + dft_t.size + fb_t.size)
    cost = pl.CostEstimate(flops=flops,
                           transcendentals=B * T_pad * N_MELS,
                           bytes_accessed=bytes_accessed)

    out = pl.pallas_call(
        _logmel_kernel,
        out_shape=jax.ShapeDtypeStruct((B, N_MELS, T_pad), jnp.float32),
        grid=(B, T_pad // TT),
        in_specs=[
            pl.BlockSpec((1, N_FFT, TT), lambda b, j: (b, 0, j)),    # frames (transposed)
            pl.BlockSpec((F_PACK, N_FFT), lambda b, j: (0, 0)),      # packed, windowed DFT
            pl.BlockSpec((N_MELS, F_PACK), lambda b, j: (0, 0)),     # duplicated mel fbank
        ],
        out_specs=pl.BlockSpec((1, N_MELS, TT), lambda b, j: (b, 0, j)),
        compiler_params=pltpu.CompilerParams(
            dimension_semantics=("parallel", "parallel")),
        cost_estimate=cost,
    )(frames_t, dft_t, fb_t)

    return out[:, :, :T]                                      # (B, n_mels, T)


if __name__ == "__main__":
    key = jax.random.PRNGKey(0)
    B, L = 2, 256                                             # small audio batch
    x = jax.random.normal(key, (B, L), dtype=jnp.float32)

    y = log_mel_spectrogram(x)
    jax.block_until_ready(y)

    expected_T = 1 + L // HOP
    assert y.shape == (B, N_MELS, expected_T), y.shape
    assert y.dtype == jnp.float32
    assert bool(jnp.all(jnp.isfinite(y)))
    print("KERNEL_OK")
</pallas_src>

<mosaic_0001>
module attributes {stable_mosaic.version = 11 : i64} {
  func.func @_logmel_kernel(%arg0: i32, %arg1: i32, %arg2: memref<1x64x128xf32, #tpu.memory_space<vmem>>, %arg3: memref<128x64xf32, #tpu.memory_space<vmem>>, %arg4: memref<16x128xf32, #tpu.memory_space<vmem>>, %arg5: memref<1x16x128xf32, #tpu.memory_space<vmem>>) attributes {dimension_semantics = [#tpu.dimension_semantics<parallel>, #tpu.dimension_semantics<parallel>], iteration_bounds = array<i64: 2, 1>, scalar_prefetch = 0 : i64, scratch_operands = 0 : i64, tpu.core_type = #tpu.core_type<tc>, window_params = [{transform_indices = @transform_0, window_bounds = array<i64: 1, 64, 128>}, {pipeline_mode = #tpu.pipeline_mode<synchronous>, transform_indices = @transform_1, window_bounds = array<i64: 128, 64>}, {pipeline_mode = #tpu.pipeline_mode<synchronous>, transform_indices = @transform_2, window_bounds = array<i64: 16, 128>}, {transform_indices = @transform_3, window_bounds = array<i64: 1, 16, 128>}]} {
    %c0 = arith.constant 0 : index
    %c0_0 = arith.constant 0 : index
    %c0_1 = arith.constant 0 : index
    %0 = vector.load %arg2[%c0, %c0_0, %c0_1] : memref<1x64x128xf32, #tpu.memory_space<vmem>>, vector<1x64x128xf32>
    %1 = vector.shape_cast %0 : vector<1x64x128xf32> to vector<64x128xf32>
    %c0_2 = arith.constant 0 : index
    %c0_3 = arith.constant 0 : index
    %2 = vector.load %arg3[%c0_2, %c0_3] : memref<128x64xf32, #tpu.memory_space<vmem>>, vector<128x64xf32>
    %cst = arith.constant dense<0.000000e+00> : vector<128x128xf32>
    %3 = tpu.matmul %2, %1, %cst {dimension_numbers = #tpu.dot_dimension_numbers<[1], [0], [0], [1], [0, 0, 1, 1], [], []>} : vector<128x64xf32>, vector<64x128xf32>, vector<128x128xf32> -> vector<128x128xf32>
    %c0_4 = arith.constant 0 : index
    %c0_5 = arith.constant 0 : index
    %4 = vector.load %arg4[%c0_4, %c0_5] : memref<16x128xf32, #tpu.memory_space<vmem>>, vector<16x128xf32>
    %5 = arith.mulf %3, %3 : vector<128x128xf32>
    %cst_6 = arith.constant dense<0.000000e+00> : vector<16x128xf32>
    %6 = tpu.matmul %4, %5, %cst_6 {dimension_numbers = #tpu.dot_dimension_numbers<[1], [0], [0], [1], [0, 0, 1, 1], [], []>} : vector<16x128xf32>, vector<128x128xf32>, vector<16x128xf32> -> vector<16x128xf32>
    %cst_7 = arith.constant 9.99999997E-7 : f32
    %7 = vector.broadcast %cst_7 : f32 to vector<16x128xf32>
    %8 = arith.maximumf %6, %7 : vector<16x128xf32>
    %9 = math.log %8 : vector<16x128xf32>
    %c0_8 = arith.constant 0 : index
    %c0_9 = arith.constant 0 : index
    %c0_10 = arith.constant 0 : index
    %10 = vector.load %arg5[%c0_8, %c0_9, %c0_10] : memref<1x16x128xf32, #tpu.memory_space<vmem>>, vector<1x16x128xf32>
    %11 = vector.shape_cast %10 : vector<1x16x128xf32> to vector<16x128xf32>
    %12 = vector.shape_cast %9 : vector<16x128xf32> to vector<1x16x128xf32>
    tpu.vector_store %arg5[%c0_8, %c0_9, %c0_10], %12 {strides = array<i32>} : memref<1x16x128xf32, #tpu.memory_space<vmem>>, vector<1x16x128xf32>,
    return
  }
  func.func @transform_0(%arg0: i32, %arg1: i32) -> (i32, i32, i32) {
    %c0_i32 = arith.constant 0 : i32
    %c0_i32_0 = arith.constant 0 : i32
    return %arg0, %c0_i32, %arg1 : i32, i32, i32
  }
  func.func @transform_1(%arg0: i32, %arg1: i32) -> (i32, i32) {
    %c0_i32 = arith.constant 0 : i32
    %c0_i32_0 = arith.constant 0 : i32
    %c0_i32_1 = arith.constant 0 : i32
    return %c0_i32, %c0_i32_0 : i32, i32
  }
  func.func @transform_2(%arg0: i32, %arg1: i32) -> (i32, i32) {
    %c0_i32 = arith.constant 0 : i32
    %c0_i32_0 = arith.constant 0 : i32
    %c0_i32_1 = arith.constant 0 : i32
    return %c0_i32, %c0_i32_0 : i32, i32
  }
  func.func @transform_3(%arg0: i32, %arg1: i32) -> (i32, i32, i32) {
    %c0_i32 = arith.constant 0 : i32
    %c0_i32_0 = arith.constant 0 : i32
    return %arg0, %c0_i32, %arg1 : i32, i32, i32
  }
}

</mosaic_0001>

<llo_original>
// kernel: tpu_custom_call.1
$region0: #{tpu_custom_call.1}
  #allocation0 [shape = 'u32[]', space=smem, size = 0x4, offset = 0x4, fixed_abs, tag = 'smem constant byte address 0x4 - core index']
  #allocation1 [shape = 'u32[72,128]{1,0:T(1,128)}', space=vmem, size = 0x9000, scoped, tag = 'internal scratch']
  %s0 = inlined_call_operand.vmem [shape: f32[2,64,128], index: 0, kind: input, shape index: {}]
  %s1 = inlined_call_operand.vmem [shape: f32[128,64], index: 1, kind: input, shape index: {}]
  %s2 = inlined_call_operand.vmem [shape: f32[16,128], index: 2, kind: input, shape index: {}]
  %s3 = inlined_call_operand.hbm [shape: f32[2,16,128], index: 3, kind: output, shape index: {}]
  %s4 = sld [smem:[#allocation0]]
  $region45: #{tpu_custom_call.1} parent=0
    _
  %s6 = ssub.s32 1, %s4
  %s7 = scalar_select 0, %s6, %s4
  $region1: #{tpu_custom_call.1} parent=0
    #allocation2 [shape = 'u8[16384]{0}', space=vmem, size = 0x4000, scoped, tag = 'output window, operand 0']
    #allocation3 [shape = 's32[2]{0}', space=sflag, size = 0x8, scoped, tag = 'scoped memory for tpu_custom_call.1']
    %8 = vsyncpa [#allocation3], 0
    %s9 = scalar_lea.sflag [#allocation3], 1
    %10 = vsyncpa %s9, 0
    loop: start=0, step=1, limit=4
    $region2: #{tpu_custom_call.1} parent=1 // loop_pre_header
      _
    $region3: #{tpu_custom_call.1} parent=1 // loop_header
      %s12 = sphi 0, %s16
      %p13 = scmp.ge.s32.totalorder %s12, 4
      %s19 = sphi 0, %s31
      %s20 = sphi 0, %s27
      %s21 = sphi 0, %s19
      %s22 = sphi 0, %s20
      %s23 = sphi 0, %s21
      %s24 = sphi 0, %s22
      %s36 = sphi 0, %s38
      %s39 = sphi 0, %s36
      %s40 = sphi 0, %s39
      %s56 = sphi 0, %s40
      %s60 = sphi 0, %s60
      %s62 = sphi 0, %s60
      %s63 = sphi 0, %s62
      %s77 = sphi 0, %s63
      %s81 = sphi 0, %s81
      %s83 = sphi 0, %s81
      %s84 = sphi 0, %s83
      %s98 = sphi 0, %s84
      %s106 = sphi 0, %s108
      %s109 = sphi 0, %s106
      %s110 = sphi 0, %s109
      %s126 = sphi 0, %s110
    $region4: #{tpu_custom_call.1} parent=1 // loop_header_branch
      %15 = sbr.rel (%p13) target = $region8
    $region5: #{tpu_custom_call.1} parent=1 // loop_body
      %s17 = ssub.s32 %s12, 1
      %s18 = ssub.s32 %s12, 2
      %s25 = sadd.s32 1, %s20
      %p26 = scmp.ge.s32.totalorder %s25, 1
      %s27 = scalar_select %p26, 0, %s25
      %s28 = sadd.s32 1, %s19
      %s29 = scalar_select %p26, %s28, %s19
      %p30 = scmp.ge.s32.totalorder %s29, 2
      %s31 = scalar_select %p30, 0, %s29
      %s32 = ssub.s32 %s19, %s31
      %s33 = ssub.s32 %s20, %s27
      %s34 = sor.u32 %s32, %s33
      %p35 = scmp.eq.s32.totalorder %s34, 0
      %s37 = sadd.s32 %s36, 1
      %s38 = scalar_select %p35, %s36, %s37
      %p41 = pneg %p35
      %p42 = scmp.eq.s32.totalorder %s12, 1
      %p43 = por %p41, %p42
      %p44 = scmp.ne.s32.totalorder %s36, %s39
      %p45 = scmp.eq.s32.totalorder %s12, 0
      %p46 = por %p44, %p45
      %p47 = scmp.ne.s32.totalorder %s36, %s39
      %p48 = scmp.eq.s32.totalorder %s17, 1
      %p49 = por %p47, %p48
      %p50 = scmp.ne.s32.totalorder %s39, %s40
      %p51 = scmp.eq.s32.totalorder %s17, 0
      %p52 = por %p50, %p51
      %p53 = scmp.ne.s32.totalorder %s39, %s40
      %p54 = scmp.eq.s32.totalorder %s18, 1
      %p55 = por %p53, %p54
      %p57 = scmp.ne.s32.totalorder %s40, %s56
      %p58 = scmp.eq.s32.totalorder %s18, 0
      %p59 = por %p57, %p58
      %s61 = sadd.s32 %s60, 1
      %p64 = scmp.eq.s32.totalorder %s12, 1
      %p65 = scmp.ne.s32.totalorder %s60, %s62
      %p66 = scmp.eq.s32.totalorder %s12, 0
      %p67 = por %p65, %p66
      %p68 = scmp.ne.s32.totalorder %s60, %s62
      %p69 = scmp.eq.s32.totalorder %s17, 1
      %p70 = por %p68, %p69
      %p71 = scmp.ne.s32.totalorder %s62, %s63
      %p72 = scmp.eq.s32.totalorder %s17, 0
      %p73 = por %p71, %p72
      %p74 = scmp.ne.s32.totalorder %s62, %s63
      %p75 = scmp.eq.s32.totalorder %s18, 1
      %p76 = por %p74, %p75
      %p78 = scmp.ne.s32.totalorder %s63, %s77
      %p79 = scmp.eq.s32.totalorder %s18, 0
      %p80 = por %p78, %p79
      %s82 = sadd.s32 %s81, 1
      %p85 = scmp.eq.s32.totalorder %s12, 1
      %p86 = scmp.ne.s32.totalorder %s81, %s83
      %p87 = scmp.eq.s32.totalorder %s12, 0
      %p88 = por %p86, %p87
      %p89 = scmp.ne.s32.totalorder %s81, %s83
      %p90 = scmp.eq.s32.totalorder %s17, 1
      %p91 = por %p89, %p90
      %p92 = scmp.ne.s32.totalorder %s83, %s84
      %p93 = scmp.eq.s32.totalorder %s17, 0
      %p94 = por %p92, %p93
      %p95 = scmp.ne.s32.totalorder %s83, %s84
      %p96 = scmp.eq.s32.totalorder %s18, 1
      %p97 = por %p95, %p96
      %p99 = scmp.ne.s32.totalorder %s84, %s98
      %p100 = scmp.eq.s32.totalorder %s18, 0
      %p101 = por %p99, %p100
      %s102 = ssub.s32 %s19, %s31
      %s103 = ssub.s32 %s20, %s27
      %s104 = sor.u32 %s102, %s103
      %p105 = scmp.eq.s32.totalorder %s104, 0
      %s107 = sadd.s32 %s106, 1
      %s108 = scalar_select %p105, %s106, %s107
      %p111 = pneg %p105
      %p112 = scmp.eq.s32.totalorder %s12, 1
      %p113 = por %p111, %p112
      %p114 = scmp.ne.s32.totalorder %s106, %s109
      %p115 = scmp.eq.s32.totalorder %s12, 0
      %p116 = por %p114, %p115
      %p117 = scmp.ne.s32.totalorder %s106, %s109
      %p118 = scmp.eq.s32.totalorder %s17, 1
      %p119 = por %p117, %p118
      %p120 = scmp.ne.s32.totalorder %s109, %s110
      %p121 = scmp.eq.s32.totalorder %s17, 0
      %p122 = por %p120, %p121
      %p123 = scmp.ne.s32.totalorder %s109, %s110
      %p124 = scmp.eq.s32.totalorder %s18, 1
      %p125 = por %p123, %p124
      %p127 = scmp.ne.s32.totalorder %s110, %s126
      %p128 = scmp.eq.s32.totalorder %s18, 0
      %p129 = por %p127, %p128
      %p130 = scmp.le.s32.totalorder 1, %s12
      %p131 = scmp.lt.s32.totalorder %s12, 3
      %p132 = pnand %p130, %p131
      %p133 = pneg %p132
      // Predicated region
      $region9: #{tpu_custom_call.1} parent=5 // pred_check
        _
      $region10: #{tpu_custom_call.1} parent=5 // pred_check_branch
        %135 = sbr.rel (%p132) target = $region12
      $region11: #{tpu_custom_call.1} parent=5 // pred_region
        %s136 = ssub.s32 %s12, 1
        // Predicated region
        $region13: #{tpu_custom_call.1} parent=11 // pred_check
          %p137 = pneg %p73
        $region14: #{tpu_custom_call.1} parent=11 // pred_check_branch
          %139 = sbr.rel (%p137) target = $region16
        $region15: #{tpu_custom_call.1} parent=11 // pred_region
          _
        $region16: #{tpu_custom_call.1} parent=11 // pred_fallthru
          _
        // Predicated region
        $region17: #{tpu_custom_call.1} parent=11 // pred_check
          %p140 = pneg %p94
        $region18: #{tpu_custom_call.1} parent=11 // pred_check_branch
          %142 = sbr.rel (%p140) target = $region20
        $region19: #{tpu_custom_call.1} parent=11 // pred_region
          _
        $region20: #{tpu_custom_call.1} parent=11 // pred_fallthru
          _
      $region12: #{tpu_custom_call.1} parent=5 // pred_fallthru
        _
      %p143 = scmp.lt.s32.totalorder %s12, 2
      // Predicated region
      $region21: #{tpu_custom_call.1} parent=5 // pred_check
        %p144 = pneg %p143
      $region22: #{tpu_custom_call.1} parent=5 // pred_check_branch
        %146 = sbr.rel (%p144) target = $region24
      $region23: #{tpu_custom_call.1} parent=5 // pred_region
        // Predicated region
        $region25: #{tpu_custom_call.1} parent=23 // pred_check
          %p147 = pneg %p46
        $region26: #{tpu_custom_call.1} parent=23 // pred_check_branch
          %149 = sbr.rel (%p147) target = $region28
        $region27: #{tpu_custom_call.1} parent=23 // pred_region
          %p150 = scmp.lt.s32.totalorder %s19, 1
          %s151 = scalar_select %p150, %s19, 1
          %p152 = scmp.lt.s32.totalorder %s20, 0
          %s153 = scalar_select %p152, %s20, 0
          %s154 = smul.addr %s151, 8
          %s155 = sadd.s32 %s153, %s154
          %s156 = smul.addr %s155, 8
          %s157 = scalar_lea.vmem %s0, %s156
        $region28: #{tpu_custom_call.1} parent=23 // pred_fallthru
          _
      $region24: #{tpu_custom_call.1} parent=5 // pred_fallthru
        _
      %p158 = scmp.le.s32.totalorder 1, %s12
      %p159 = scmp.lt.s32.totalorder %s12, 3
      %p160 = pnand %p158, %p159
      %p161 = pneg %p160
      // Predicated region
      $region29: #{tpu_custom_call.1} parent=5 // pred_check
        _
      $region30: #{tpu_custom_call.1} parent=5 // pred_check_branch
        %163 = sbr.rel (%p160) target = $region32
      $region31: #{tpu_custom_call.1} parent=5 // pred_region
        %s164 = ssub.s32 %s12, 1
        %p165 = scmp.lt.s32.totalorder %s21, 1
        %s166 = scalar_select %p165, %s21, 1
        %p167 = scmp.lt.s32.totalorder %s22, 0
        %s168 = scalar_select %p167, %s22, 0
        %s169 = smul.addr %s166, 8
        %s170 = sadd.s32 %s168, %s169
        %s171 = smul.addr %s170, 8
        %s172 = scalar_lea.vmem %s0, %s171
        %p173 = pneg %p52
        %p174 = pneg %p49
        %p175 = pneg %p73
        %p176 = pneg %p70
        %p177 = pneg %p94
        %p178 = pneg %p91
        %p179 = pneg %p122
        %p180 = pneg %p119
        %s181 = sand.u32 %s109, 1
        %s182 = scalar_lea.sflag [#allocation3], %s181
        %s183 = sand.u32 %s109, 1
        %s184 = smul.addr %s183, 16
        %s185 = scalar_lea.vmem [#allocation2], %s184
        %p186 = scmp.lt.s32.totalorder %s21, 1
        %s187 = scalar_select %p186, %s21, 1
        %p188 = scmp.lt.s32.totalorder %s22, 0
        %s189 = scalar_select %p188, %s22, 0
        %s190 = smul.addr %s187, 8
        %s191 = sadd.s32 %s189, %s190
        %s192 = smul.addr %s191, 8
        %s193 = scalar_lea.vmem %s0, %s192
        %v194 = vld [vmem:[%s193] sm:$0xff]
        %v195 = vld [vmem:[%s193 + $0x8] sm:$0xff]
        %v196 = vld [vmem:[%s193 + $0x10] sm:$0xff]
        %v197 = vld [vmem:[%s193 + $0x18] sm:$0xff]
        %v198 = vld [vmem:[%s193 + $0x20] sm:$0xff]
        %v199 = vld [vmem:[%s193 + $0x28] sm:$0xff]
        %v200 = vld [vmem:[%s193 + $0x30] sm:$0xff]
        %v201 = vld [vmem:[%s193 + $0x38] sm:$0xff]
        %v202 = vld [vmem:[%s1] sm:$0xff]
        %v203 = vld [vmem:[%s1 + $0x8] sm:$0xff]
        %v204 = vld [vmem:[%s1 + $0x10] sm:$0xff]
        %v205 = vld [vmem:[%s1 + $0x18] sm:$0xff]
        %v206 = vld [vmem:[%s1 + $0x20] sm:$0xff]
        %v207 = vld [vmem:[%s1 + $0x28] sm:$0xff]
        %v208 = vld [vmem:[%s1 + $0x30] sm:$0xff]
        %v209 = vld [vmem:[%s1 + $0x38] sm:$0xff]
        %v210 = vld [vmem:[%s1 + $0x40] sm:$0xff]
        %v211 = vld [vmem:[%s1 + $0x48] sm:$0xff]
        %v212 = vld [vmem:[%s1 + $0x50] sm:$0xff]
        %v213 = vld [vmem:[%s1 + $0x58] sm:$0xff]
        %v214 = vld [vmem:[%s1 + $0x60] sm:$0xff]
        %v215 = vld [vmem:[%s1 + $0x68] sm:$0xff]
        %v216 = vld [vmem:[%s1 + $0x70] sm:$0xff]
        %v217 = vld [vmem:[%s1 + $0x78] sm:$0xff]
        %vm218 = vcmask 523264
        %v220 = vsel %vm218, %v202, 0
        %v223 = vsel %vm218, %v203, 0
        %v226 = vsel %vm218, %v204, 0
        %v229 = vsel %vm218, %v205, 0
        %v232 = vsel %vm218, %v206, 0
        %v235 = vsel %vm218, %v207, 0
        %v238 = vsel %vm218, %v208, 0
        %v241 = vsel %vm218, %v209, 0
        %v244 = vsel %vm218, %v210, 0
        %v247 = vsel %vm218, %v211, 0
        %v250 = vsel %vm218, %v212, 0
        %v253 = vsel %vm218, %v213, 0
        %v256 = vsel %vm218, %v214, 0
        %v259 = vsel %vm218, %v215, 0
        %v262 = vsel %vm218, %v216, 0
        %v265 = vsel %vm218, %v217, 0
        %267 = vmatpush.msra.mxu0 0.0
        %268 = vmatpush.msra.mxu0 0.0
        %269 = vmatpush.msra.mxu0 0.0
        %270 = vmatpush.msra.mxu0 0.0
        %271 = vmatpush.msra.mxu0 0.0
        %272 = vmatpush.msra.mxu0 0.0
        %273 = vmatpush.msra.mxu0 0.0
        %274 = vmatpush.msra.mxu0 0.0
        %275 = vmatpush.msra.mxu0 %v201
        %276 = vmatpush.msra.mxu0 %v200
        %277 = vmatpush.msra.mxu0 %v199
        %278 = vmatpush.msra.mxu0 %v198
        %279 = vmatpush.msra.mxu0 %v197
        %280 = vmatpush.msra.mxu0 %v196
        %281 = vmatpush.msra.mxu0 %v195
        %282 = vmatpush.msra.mxu0 %v194
        %283 = vmatmul.f32.gmra.mxu0 %v220
        %v284 = vpop.f32.mrf.mxu0
        %v285 = vadd.f32 0.0, %v284
        %286 = vmatmul.f32.gmra.mxu0 %v223
        %v287 = vpop.f32.mrf.mxu0
        %v288 = vadd.f32 0.0, %v287
        %289 = vmatmul.f32.gmra.mxu0 %v226
        %v290 = vpop.f32.mrf.mxu0
        %v291 = vadd.f32 0.0, %v290
        %292 = vmatmul.f32.gmra.mxu0 %v229
        %v293 = vpop.f32.mrf.mxu0
        %v294 = vadd.f32 0.0, %v293
        %295 = vmatmul.f32.gmra.mxu0 %v232
        %v296 = vpop.f32.mrf.mxu0
        %v297 = vadd.f32 0.0, %v296
        %298 = vmatmul.f32.gmra.mxu0 %v235
        %v299 = vpop.f32.mrf.mxu0
        %v300 = vadd.f32 0.0, %v299
        %301 = vmatmul.f32.gmra.mxu0 %v238
        %v302 = vpop.f32.mrf.mxu0
        %v303 = vadd.f32 0.0, %v302
        %304 = vmatmul.f32.gmra.mxu0 %v241
        %v305 = vpop.f32.mrf.mxu0
        %v306 = vadd.f32 0.0, %v305
        %307 = vmatmul.f32.gmra.mxu0 %v244
        %v308 = vpop.f32.mrf.mxu0
        %v309 = vadd.f32 0.0, %v308
        %310 = vmatmul.f32.gmra.mxu0 %v247
        %v311 = vpop.f32.mrf.mxu0
        %v312 = vadd.f32 0.0, %v311
        %313 = vmatmul.f32.gmra.mxu0 %v250
        %v314 = vpop.f32.mrf.mxu0
        %v315 = vadd.f32 0.0, %v314
        %316 = vmatmul.f32.gmra.mxu0 %v253
        %v317 = vpop.f32.mrf.mxu0
        %v318 = vadd.f32 0.0, %v317
        %319 = vmatmul.f32.gmra.mxu0 %v256
        %v320 = vpop.f32.mrf.mxu0
        %v321 = vadd.f32 0.0, %v320
        %322 = vmatmul.f32.gmra.mxu0 %v259
        %v323 = vpop.f32.mrf.mxu0
        %v324 = vadd.f32 0.0, %v323
        %325 = vmatmul.f32.gmra.mxu0 %v262
        %v326 = vpop.f32.mrf.mxu0
        %v327 = vadd.f32 0.0, %v326
        %328 = vmatmul.f32.gmra.mxu0 %v265
        %v329 = vpop.f32.mrf.mxu0
        %v330 = vadd.f32 0.0, %v329
        %331 = vdwg.mxu0
        %v332 = vld [vmem:[%s2] sm:$0xff]
        %v333 = vld [vmem:[%s2 + $0x8] sm:$0xff]
        %v334 = vmul.f32 %v285, %v285
        %v335 = vmul.f32 %v288, %v288
        %v336 = vmul.f32 %v291, %v291
        %v337 = vmul.f32 %v294, %v294
        %v338 = vmul.f32 %v297, %v297
        %v339 = vmul.f32 %v300, %v300
        %v340 = vmul.f32 %v303, %v303
        %v341 = vmul.f32 %v306, %v306
        %v342 = vmul.f32 %v309, %v309
        %v343 = vmul.f32 %v312, %v312
        %v344 = vmul.f32 %v315, %v315
        %v345 = vmul.f32 %v318, %v318
        %v346 = vmul.f32 %v321, %v321
        %v347 = vmul.f32 %v324, %v324
        %v348 = vmul.f32 %v327, %v327
        %v349 = vmul.f32 %v330, %v330
        %350 = vmatpush.msra.mxu0 %v349
        %351 = vmatpush.msra.mxu0 %v348
        %352 = vmatpush.msra.mxu0 %v347
        %353 = vmatpush.msra.mxu0 %v346
        %354 = vmatpush.msra.mxu0 %v345
        %355 = vmatpush.msra.mxu0 %v344
        %356 = vmatpush.msra.mxu0 %v343
        %357 = vmatpush.msra.mxu0 %v342
        %358 = vmatpush.msra.mxu0 %v341
        %359 = vmatpush.msra.mxu0 %v340
        %360 = vmatpush.msra.mxu0 %v339
        %361 = vmatpush.msra.mxu0 %v338
        %362 = vmatpush.msra.mxu0 %v337
        %363 = vmatpush.msra.mxu0 %v336
        %364 = vmatpush.msra.mxu0 %v335
        %365 = vmatpush.msra.mxu0 %v334
        %366 = vmatmul.f32.gmra.mxu0 %v332
        %v367 = vpop.f32.mrf.mxu0
        %v368 = vadd.f32 0.0, %v367
        %369 = vmatmul.f32.gmra.mxu0 %v333
        %v370 = vpop.f32.mrf.mxu0
        %v371 = vadd.f32 0.0, %v370
        %372 = vdwg.mxu0
        %v373 = vmax.f32 %v368, 1e-06
        %v374 = vmax.f32 %v371, 1e-06
        %v375 = vlog2.pop %v373
        %v376 = vmul.f32 %v375, 0.6931472
        %v377 = vlog2.pop %v374
        %v378 = vmul.f32 %v377, 0.6931472
        %379 = vst [vmem:[%s185] sm:$0xff] %v376
        %380 = vst [vmem:[%s185 + $0x8] sm:$0xff] %v378
        %s381 = sand.u32 %s109, 1
        %s382 = scalar_lea.sflag [#allocation3], %s381
        %s383 = sand.u32 %s109, 1
        %s384 = smul.addr %s383, 16
        %s385 = scalar_lea.vmem [#allocation2], %s384
        // Predicated region
        $region33: #{tpu_custom_call.1} parent=31 // pred_check
          %p386 = pneg %p119
        $region34: #{tpu_custom_call.1} parent=31 // pred_check_branch
          %388 = sbr.rel (%p386) target = $region36
        $region35: #{tpu_custom_call.1} parent=31 // pred_region
          %390 = vsyncadd %s382, 0
          %s391 = smul.addr %s21, 2
          %s392 = sadd.s32 %s22, %s391
          %s393 = smul.addr %s392, 8
          %s394 = scalar_lea.hbm %s3, %s393
          %s395 = sshll.u32 %s385, 4
          %s396 = int_to_ptr.vmem [resolvable:$true] %s395
          %s397 = sshll.u32 %s394, 4
          %s398 = int_to_ptr.hbm [resolvable:$true] %s397
          %403 = dma.vmem_to_hbm [thread:$0]  %s396, 256, %s398, %s382, 128, 128, 8
        $region36: #{tpu_custom_call.1} parent=31 // pred_fallthru
          _
      $region32: #{tpu_custom_call.1} parent=5 // pred_fallthru
        _
      %p404 = scmp.le.s32.totalorder 2, %s12
      // Predicated region
      $region37: #{tpu_custom_call.1} parent=5 // pred_check
        %p405 = pneg %p404
      $region38: #{tpu_custom_call.1} parent=5 // pred_check_branch
        %407 = sbr.rel (%p405) target = $region40
      $region39: #{tpu_custom_call.1} parent=5 // pred_region
        %s408 = ssub.s32 %s12, 2
        // Predicated region
        $region41: #{tpu_custom_call.1} parent=39 // pred_check
          %p409 = pneg %p125
        $region42: #{tpu_custom_call.1} parent=39 // pred_check_branch
          %411 = sbr.rel (%p409) target = $region44
        $region43: #{tpu_custom_call.1} parent=39 // pred_region
          %s412 = sand.u32 %s110, 1
          %s413 = scalar_lea.sflag [#allocation3], %s412
          %s414 = sand.u32 %s110, 1
          %s415 = smul.addr %s414, 16
          %s416 = scalar_lea.vmem [#allocation2], %s415
          %418 = dma.done %s413, 256
        $region44: #{tpu_custom_call.1} parent=39 // pred_fallthru
          _
      $region40: #{tpu_custom_call.1} parent=5 // pred_fallthru
        _
    $region6: #{tpu_custom_call.1} parent=1 // loop_footer
      %s16 = sadd.s32 1, %s12
    $region7: #{tpu_custom_call.1} parent=1 // loop_footer_branch
      %11 = sbr.rel target = $region3
    $region8: #{tpu_custom_call.1} parent=1 // loop_exit
      _
    %419 = vsyncpa [#allocation3], 1
    %s420 = scalar_lea.sflag [#allocation3], 1
    %421 = vsyncpa %s420, 1

</llo_original>
